<compile_context>
chip_gen: v7x
topology: tpu7x:2x2x1
jax: 0.10.0
libtpu: 0.0.40
codegen_flags: <defaults>
</compile_context>

<pallas_src>
import math

import jax
import jax.numpy as jnp
import numpy as np
from jax.experimental import pallas as pl
from jax.experimental.pallas import tpu as pltpu

_EPS = 1e-06
_LANES = 128            # vreg lane width (fast axis)
_SUBLANES = 8           # f32 vreg sublane width
_MAX_TILE_ROWS = 1024   # rows-of-128 per tile: 3*1024*128*4B = 1.5 MiB / block ref
_MIN_TOTAL_BLOCKS = 4   # keep both v7x TCs busy and give the pipeline real steps

# Deterministic "parameters" (registered buffers in the PyTorch module).
_RGB_TO_LMS = np.array(
    [[0.3811, 0.5783, 0.0402],
     [0.1967, 0.7244, 0.0782],
     [0.0241, 0.1288, 0.8444]], dtype=np.float32)

# loglms_to_lab = diag(s) @ B, B = [[1,1,1],[1,1,-2],[1,-1,0]].  With
# u_c = s_c * log(lms_c):  lab0 = u0+u1+u2, lab1 = u0+u1-u2, lab2 = u0-2*u1.
_S0 = np.float32(1.0 / math.sqrt(3.0))
_S1 = np.float32(1.0 / math.sqrt(6.0))
_S2 = np.float32(1.0 / math.sqrt(2.0))

_SCALE = np.diag([_S0, _S1, _S2]).astype(np.float32)
_LOGLMS_TO_LAB = (_SCALE @ np.array(
    [[1.0, 1.0, 1.0],
     [1.0, 1.0, -2.0],
     [1.0, -1.0, 0.0]], dtype=np.float32)).astype(np.float32)


def _cdiv(a: int, b: int) -> int:
    return -(-a // b)


def _round_up(a: int, b: int) -> int:
    return _cdiv(a, b) * b


def _rgb_to_lab_kernel(x_ref, o_ref):
    # Block: (1, 3, tile_rows, 128).  Channels sit on an outer (non-vreg) dim;
    # each per-channel slab is a dense (tile_rows, 128) tile -> full vregs.
    lo = jnp.float32(_EPS)
    hi = jnp.float32(1.0 - _EPS)
    r = jnp.clip(x_ref[0, 0], lo, hi)
    g = jnp.clip(x_ref[0, 1], lo, hi)
    b = jnp.clip(x_ref[0, 2], lo, hi)

    # einsum 'bchw,cd->bdhw': out[d] = sum_c x[c] * M[c, d]
    # (VPU immediates; intentionally NOT an MXU dot for a K=3 contraction).
    M = _RGB_TO_LMS
    lms_l = r * float(M[0, 0]) + g * float(M[1, 0]) + b * float(M[2, 0])
    lms_m = r * float(M[0, 1]) + g * float(M[1, 1]) + b * float(M[2, 1])
    lms_s = r * float(M[0, 2]) + g * float(M[1, 2]) + b * float(M[2, 2])

    # EUP logs; diag(scale) folded into 3 muls; B applied with 5 add/sub.
    u0 = jnp.log(lms_l) * _S0
    u1 = jnp.log(lms_m) * _S1
    u2 = jnp.log(lms_s) * _S2

    t = u0 + u1
    o_ref[0, 0] = t + u2          # L
    o_ref[0, 1] = t - u2          # a
    o_ref[0, 2] = u0 - 2.0 * u1   # b


def _choose_tiling(rows: int, batch: int):
    """Pick (tile_rows, n_tiles) for the pixel-row axis."""
    n_tiles = max(_cdiv(rows, _MAX_TILE_ROWS), _cdiv(_MIN_TOTAL_BLOCKS, batch))
    n_tiles = max(1, min(n_tiles, rows // _SUBLANES))   # tiles of >= 8 rows
    tile_rows = _round_up(_cdiv(rows, n_tiles), _SUBLANES)
    if tile_rows >= rows:
        # Single full-extent block along rows (full-dim block shape is legal
        # even when rows % 8 != 0).
        return rows, 1
    return tile_rows, _cdiv(rows, tile_rows)


def rgb_to_lab(inputs: jax.Array) -> jax.Array:
    """RGB (NCHW, values ~[0,1]) -> Lab.  inputs: [B, 3, H, W] float32."""
    B, C, H, W = inputs.shape
    assert C == 3, "RGBtoLab expects 3 input channels"
    assert inputs.dtype == jnp.float32, "kernel tiling assumes float32"
    hw = H * W

    x = inputs.reshape(B, C, hw)
    hw_pad = _round_up(hw, _LANES)
    if hw_pad != hw:
        # Only pad to the next 128-lane multiple (<=127 junk pixels).  Padded
        # pixels are clamped to [eps, 1-eps] in-kernel before the log.
        # TODO(synk): handle the <128-pixel ragged tail in-kernel (masked tail
        # store) to make the unaligned-H*W path copy-free as well.
        x = jnp.pad(x, ((0, 0), (0, 0), (0, hw_pad - hw)))
    rows = hw_pad // _LANES
    x = x.reshape(B, C, rows, _LANES)     # free view: hw_pad % 128 == 0

    tile_rows, n_tiles = _choose_tiling(rows, B)

    elem_bytes = jnp.dtype(inputs.dtype).itemsize
    cost = pl.CostEstimate(
        flops=42 * B * hw,                # 2x(3x3 MAC) + clamps, per pixel
        transcendentals=3 * B * hw,       # 3 logs / pixel
        bytes_accessed=2 * B * C * hw_pad * elem_bytes,
    )

    out = pl.pallas_call(
        _rgb_to_lab_kernel,
        out_shape=jax.ShapeDtypeStruct((B, C, rows, _LANES), inputs.dtype),
        grid_spec=pltpu.PrefetchScalarGridSpec(
            num_scalar_prefetch=0,
            grid=(B, n_tiles),
            in_specs=[pl.BlockSpec((1, C, tile_rows, _LANES),
                                   lambda b, t: (b, 0, t, 0))],
            out_specs=pl.BlockSpec((1, C, tile_rows, _LANES),
                                   lambda b, t: (b, 0, t, 0)),
        ),
        compiler_params=pltpu.CompilerParams(
            dimension_semantics=("parallel", "parallel")),
        cost_estimate=cost,
    )(x)

    out = out.reshape(B, C, hw_pad)
    if hw_pad != hw:
        out = out[:, :, :hw]
    return out.reshape(B, C, H, W)


def _reference(inputs: jax.Array) -> jax.Array:
    """Pure-JAX reference matching the PyTorch forward exactly."""
    x = jnp.clip(inputs, _EPS, 1.0 - _EPS)
    lms = jnp.einsum("bchw,cd->bdhw", x, jnp.asarray(_RGB_TO_LMS))
    lab = jnp.einsum("bchw,cd->bdhw", jnp.log(lms), jnp.asarray(_LOGLMS_TO_LAB))
    return lab


if __name__ == "__main__":
    key = jax.random.PRNGKey(0)

    # 1) Small aligned case (values outside [0,1] exercise the clamp).
    x = jax.random.uniform(key, (2, 3, 16, 16), dtype=jnp.float32,
                           minval=-0.1, maxval=1.1)
    lab = rgb_to_lab(x)
    jax.block_until_ready(lab)
    np.testing.assert_allclose(np.asarray(lab), np.asarray(_reference(x)),
                               rtol=1e-5, atol=1e-5)

    # 2) H*W not a multiple of 128: exercises the minimal lane-pad path.
    x2 = jax.random.uniform(jax.random.PRNGKey(1), (1, 3, 17, 23),
                            dtype=jnp.float32, minval=0.0, maxval=1.0)
    lab2 = rgb_to_lab(x2)
    jax.block_until_ready(lab2)
    np.testing.assert_allclose(np.asarray(lab2), np.asarray(_reference(x2)),
                               rtol=1e-5, atol=1e-5)

    # 3) Multi-tile grid with a ragged last block (rows=20, tile_rows=16):
    #    exercises boundary masking (no host-side row padding).
    x3 = jax.random.uniform(jax.random.PRNGKey(2), (1, 3, 40, 64),
                            dtype=jnp.float32, minval=0.0, maxval=1.0)
    lab3 = rgb_to_lab(x3)
    jax.block_until_ready(lab3)
    np.testing.assert_allclose(np.asarray(lab3), np.asarray(_reference(x3)),
                               rtol=1e-5, atol=1e-5)

    print("KERNEL_OK")
</pallas_src>

<mosaic_0001>
module attributes {stable_mosaic.version = 11 : i64} {
  func.func @_rgb_to_lab_kernel(%arg0: i32, %arg1: i32, %arg2: memref<1x3x2x128xf32, #tpu.memory_space<vmem>>, %arg3: memref<1x3x2x128xf32, #tpu.memory_space<vmem>>) attributes {dimension_semantics = [#tpu.dimension_semantics<parallel>, #tpu.dimension_semantics<parallel>], iteration_bounds = array<i64: 2, 1>, scalar_prefetch = 0 : i64, scratch_operands = 0 : i64, tpu.core_type = #tpu.core_type<tc>, window_params = [{transform_indices = @transform_0, window_bounds = array<i64: 1, 3, 2, 128>}, {transform_indices = @transform_1, window_bounds = array<i64: 1, 3, 2, 128>}]} {
    %c0 = arith.constant 0 : index
    %c0_0 = arith.constant 0 : index
    %c0_1 = arith.constant 0 : index
    %c0_2 = arith.constant 0 : index
    %0 = vector.load %arg2[%c0, %c0_0, %c0_1, %c0_2] : memref<1x3x2x128xf32, #tpu.memory_space<vmem>>, vector<1x1x2x128xf32>
    %1 = vector.shape_cast %0 : vector<1x1x2x128xf32> to vector<2x128xf32>
    %cst = arith.constant 9.99999997E-7 : f32
    %cst_3 = arith.constant 0.999998986 : f32
    %2 = vector.broadcast %cst : f32 to vector<2x128xf32>
    %3 = arith.maximumf %2, %1 : vector<2x128xf32>
    %4 = vector.broadcast %cst_3 : f32 to vector<2x128xf32>
    %5 = arith.minimumf %4, %3 : vector<2x128xf32>
    %c0_4 = arith.constant 0 : index
    %c1 = arith.constant 1 : index
    %c0_5 = arith.constant 0 : index
    %c0_6 = arith.constant 0 : index
    %6 = vector.load %arg2[%c0_4, %c1, %c0_5, %c0_6] : memref<1x3x2x128xf32, #tpu.memory_space<vmem>>, vector<1x1x2x128xf32>
    %7 = vector.shape_cast %6 : vector<1x1x2x128xf32> to vector<2x128xf32>
    %cst_7 = arith.constant 9.99999997E-7 : f32
    %cst_8 = arith.constant 0.999998986 : f32
    %8 = vector.broadcast %cst_7 : f32 to vector<2x128xf32>
    %9 = arith.maximumf %8, %7 : vector<2x128xf32>
    %10 = vector.broadcast %cst_8 : f32 to vector<2x128xf32>
    %11 = arith.minimumf %10, %9 : vector<2x128xf32>
    %c0_9 = arith.constant 0 : index
    %c2 = arith.constant 2 : index
    %c0_10 = arith.constant 0 : index
    %c0_11 = arith.constant 0 : index
    %12 = vector.load %arg2[%c0_9, %c2, %c0_10, %c0_11] : memref<1x3x2x128xf32, #tpu.memory_space<vmem>>, vector<1x1x2x128xf32>
    %13 = vector.shape_cast %12 : vector<1x1x2x128xf32> to vector<2x128xf32>
    %cst_12 = arith.constant 9.99999997E-7 : f32
    %cst_13 = arith.constant 0.999998986 : f32
    %14 = vector.broadcast %cst_12 : f32 to vector<2x128xf32>
    %15 = arith.maximumf %14, %13 : vector<2x128xf32>
    %16 = vector.broadcast %cst_13 : f32 to vector<2x128xf32>
    %17 = arith.minimumf %16, %15 : vector<2x128xf32>
    %cst_14 = arith.constant 3.811000e-01 : f32
    %18 = vector.broadcast %cst_14 : f32 to vector<2x128xf32>
    %19 = arith.mulf %5, %18 : vector<2x128xf32>
    %cst_15 = arith.constant 1.967000e-01 : f32
    %20 = vector.broadcast %cst_15 : f32 to vector<2x128xf32>
    %21 = arith.mulf %11, %20 : vector<2x128xf32>
    %22 = arith.addf %19, %21 : vector<2x128xf32>
    %cst_16 = arith.constant 2.410000e-02 : f32
    %23 = vector.broadcast %cst_16 : f32 to vector<2x128xf32>
    %24 = arith.mulf %17, %23 : vector<2x128xf32>
    %25 = arith.addf %22, %24 : vector<2x128xf32>
    %cst_17 = arith.constant 5.783000e-01 : f32
    %26 = vector.broadcast %cst_17 : f32 to vector<2x128xf32>
    %27 = arith.mulf %5, %26 : vector<2x128xf32>
    %cst_18 = arith.constant 0.724399983 : f32
    %28 = vector.broadcast %cst_18 : f32 to vector<2x128xf32>
    %29 = arith.mulf %11, %28 : vector<2x128xf32>
    %30 = arith.addf %27, %29 : vector<2x128xf32>
    %cst_19 = arith.constant 1.288000e-01 : f32
    %31 = vector.broadcast %cst_19 : f32 to vector<2x128xf32>
    %32 = arith.mulf %17, %31 : vector<2x128xf32>
    %33 = arith.addf %30, %32 : vector<2x128xf32>
    %cst_20 = arith.constant 4.020000e-02 : f32
    %34 = vector.broadcast %cst_20 : f32 to vector<2x128xf32>
    %35 = arith.mulf %5, %34 : vector<2x128xf32>
    %cst_21 = arith.constant 7.820000e-02 : f32
    %36 = vector.broadcast %cst_21 : f32 to vector<2x128xf32>
    %37 = arith.mulf %11, %36 : vector<2x128xf32>
    %38 = arith.addf %35, %37 : vector<2x128xf32>
    %cst_22 = arith.constant 0.844399988 : f32
    %39 = vector.broadcast %cst_22 : f32 to vector<2x128xf32>
    %40 = arith.mulf %17, %39 : vector<2x128xf32>
    %41 = arith.addf %38, %40 : vector<2x128xf32>
    %42 = math.log %25 : vector<2x128xf32>
    %cst_23 = arith.constant 0.577350259 : f32
    %43 = vector.broadcast %cst_23 : f32 to vector<2x128xf32>
    %44 = arith.mulf %42, %43 : vector<2x128xf32>
    %45 = math.log %33 : vector<2x128xf32>
    %cst_24 = arith.constant 0.408248305 : f32
    %46 = vector.broadcast %cst_24 : f32 to vector<2x128xf32>
    %47 = arith.mulf %45, %46 : vector<2x128xf32>
    %48 = math.log %41 : vector<2x128xf32>
    %cst_25 = arith.constant 0.707106769 : f32
    %49 = vector.broadcast %cst_25 : f32 to vector<2x128xf32>
    %50 = arith.mulf %48, %49 : vector<2x128xf32>
    %51 = arith.addf %44, %47 : vector<2x128xf32>
    %52 = arith.addf %51, %50 : vector<2x128xf32>
    %c0_26 = arith.constant 0 : index
    %c0_27 = arith.constant 0 : index
    %c0_28 = arith.constant 0 : index
    %c0_29 = arith.constant 0 : index
    %53 = vector.load %arg3[%c0_26, %c0_27, %c0_28, %c0_29] : memref<1x3x2x128xf32, #tpu.memory_space<vmem>>, vector<1x1x2x128xf32>
    %54 = vector.shape_cast %53 : vector<1x1x2x128xf32> to vector<2x128xf32>
    %55 = vector.shape_cast %52 : vector<2x128xf32> to vector<1x1x2x128xf32>
    tpu.vector_store %arg3[%c0_26, %c0_27, %c0_28, %c0_29], %55 {strides = array<i32>} : memref<1x3x2x128xf32, #tpu.memory_space<vmem>>, vector<1x1x2x128xf32>,
    %56 = arith.subf %51, %50 : vector<2x128xf32>
    %c0_30 = arith.constant 0 : index
    %c1_31 = arith.constant 1 : index
    %c0_32 = arith.constant 0 : index
    %c0_33 = arith.constant 0 : index
    %57 = vector.load %arg3[%c0_30, %c1_31, %c0_32, %c0_33] : memref<1x3x2x128xf32, #tpu.memory_space<vmem>>, vector<1x1x2x128xf32>
    %58 = vector.shape_cast %57 : vector<1x1x2x128xf32> to vector<2x128xf32>
    %59 = vector.shape_cast %56 : vector<2x128xf32> to vector<1x1x2x128xf32>
    tpu.vector_store %arg3[%c0_30, %c1_31, %c0_32, %c0_33], %59 {strides = array<i32>} : memref<1x3x2x128xf32, #tpu.memory_space<vmem>>, vector<1x1x2x128xf32>,
    %cst_34 = arith.constant 2.000000e+00 : f32
    %60 = vector.broadcast %cst_34 : f32 to vector<2x128xf32>
    %61 = arith.mulf %60, %47 : vector<2x128xf32>
    %62 = arith.subf %44, %61 : vector<2x128xf32>
    %c0_35 = arith.constant 0 : index
    %c2_36 = arith.constant 2 : index
    %c0_37 = arith.constant 0 : index
    %c0_38 = arith.constant 0 : index
    %63 = vector.load %arg3[%c0_35, %c2_36, %c0_37, %c0_38] : memref<1x3x2x128xf32, #tpu.memory_space<vmem>>, vector<1x1x2x128xf32>
    %64 = vector.shape_cast %63 : vector<1x1x2x128xf32> to vector<2x128xf32>
    %65 = vector.shape_cast %62 : vector<2x128xf32> to vector<1x1x2x128xf32>
    tpu.vector_store %arg3[%c0_35, %c2_36, %c0_37, %c0_38], %65 {strides = array<i32>} : memref<1x3x2x128xf32, #tpu.memory_space<vmem>>, vector<1x1x2x128xf32>,
    return
  }
  func.func @transform_0(%arg0: i32, %arg1: i32) -> (i32, i32, i32, i32) {
    %c0_i32 = arith.constant 0 : i32
    %c0_i32_0 = arith.constant 0 : i32
    %c0_i32_1 = arith.constant 0 : i32
    return %arg0, %c0_i32, %arg1, %c0_i32_0 : i32, i32, i32, i32
  }
  func.func @transform_1(%arg0: i32, %arg1: i32) -> (i32, i32, i32, i32) {
    %c0_i32 = arith.constant 0 : i32
    %c0_i32_0 = arith.constant 0 : i32
    %c0_i32_1 = arith.constant 0 : i32
    return %arg0, %c0_i32, %arg1, %c0_i32_0 : i32, i32, i32, i32
  }
}

</mosaic_0001>

<llo_original>
// kernel: tpu_custom_call.1
$region0: #{tpu_custom_call.1}
  #allocation0 [shape = 'u32[]', space=smem, size = 0x4, offset = 0x4, fixed_abs, tag = 'smem constant byte address 0x4 - core index']
  #allocation1 [shape = 'u32[144,128]{1,0:T(1,128)}', space=vmem, size = 0x12000, scoped, tag = 'internal scratch']
  %s0 = inlined_call_operand.hbm [shape: f32[2,3,2,128], index: 0, kind: input, shape index: {}]
  %s1 = inlined_call_operand.hbm [shape: f32[2,3,2,128], index: 1, kind: output, shape index: {}]
  %s2 = sld [smem:[#allocation0]]
  $region41: #{tpu_custom_call.1} parent=0
    _
  %s4 = ssub.s32 1, %s2
  %s5 = scalar_select 0, %s4, %s2
  $region1: #{tpu_custom_call.1} parent=0
    #allocation2 [shape = 'u8[6144]{0}', space=vmem, size = 0x1800, scoped, tag = 'input window, operand 0']
    #allocation3 [shape = 's32[2]{0}', space=sflag, size = 0x8, scoped, tag = 'scoped memory for tpu_custom_call.1']
    #allocation4 [shape = 's32[2]{0}', space=sflag, size = 0x8, scoped, tag = 'scoped memory for tpu_custom_call.1']
    #allocation5 [shape = 'u8[6144]{0}', space=vmem, size = 0x1800, scoped, tag = 'output window, operand 0']
    %6 = vsyncpa [#allocation3], 0
    %s7 = scalar_lea.sflag [#allocation3], 1
    %8 = vsyncpa %s7, 0
    %9 = vsyncpa [#allocation4], 0
    %s10 = scalar_lea.sflag [#allocation4], 1
    %11 = vsyncpa %s10, 0
    loop: start=0, step=1, limit=4
    $region2: #{tpu_custom_call.1} parent=1 // loop_pre_header
      _
    $region3: #{tpu_custom_call.1} parent=1 // loop_header
      %s13 = sphi 0, %s17
      %p14 = scmp.ge.s32.totalorder %s13, 4
      %s20 = sphi 0, %s32
      %s21 = sphi 0, %s28
      %s22 = sphi 0, %s20
      %s23 = sphi 0, %s21
      %s24 = sphi 0, %s22
      %s25 = sphi 0, %s23
      %s37 = sphi 0, %s39
      %s40 = sphi 0, %s37
      %s41 = sphi 0, %s40
      %s57 = sphi 0, %s41
      %s65 = sphi 0, %s67
      %s68 = sphi 0, %s65
      %s69 = sphi 0, %s68
      %s85 = sphi 0, %s69
    $region4: #{tpu_custom_call.1} parent=1 // loop_header_branch
      %16 = sbr.rel (%p14) target = $region8
    $region5: #{tpu_custom_call.1} parent=1 // loop_body
      %s18 = ssub.s32 %s13, 1
      %s19 = ssub.s32 %s13, 2
      %s26 = sadd.s32 1, %s21
      %p27 = scmp.ge.s32.totalorder %s26, 1
      %s28 = scalar_select %p27, 0, %s26
      %s29 = sadd.s32 1, %s20
      %s30 = scalar_select %p27, %s29, %s20
      %p31 = scmp.ge.s32.totalorder %s30, 2
      %s32 = scalar_select %p31, 0, %s30
      %s33 = ssub.s32 %s20, %s32
      %s34 = ssub.s32 %s21, %s28
      %s35 = sor.u32 %s33, %s34
      %p36 = scmp.eq.s32.totalorder %s35, 0
      %s38 = sadd.s32 %s37, 1
      %s39 = scalar_select %p36, %s37, %s38
      %p42 = pneg %p36
      %p43 = scmp.eq.s32.totalorder %s13, 1
      %p44 = por %p42, %p43
      %p45 = scmp.ne.s32.totalorder %s37, %s40
      %p46 = scmp.eq.s32.totalorder %s13, 0
      %p47 = por %p45, %p46
      %p48 = scmp.ne.s32.totalorder %s37, %s40
      %p49 = scmp.eq.s32.totalorder %s18, 1
      %p50 = por %p48, %p49
      %p51 = scmp.ne.s32.totalorder %s40, %s41
      %p52 = scmp.eq.s32.totalorder %s18, 0
      %p53 = por %p51, %p52
      %p54 = scmp.ne.s32.totalorder %s40, %s41
      %p55 = scmp.eq.s32.totalorder %s19, 1
      %p56 = por %p54, %p55
      %p58 = scmp.ne.s32.totalorder %s41, %s57
      %p59 = scmp.eq.s32.totalorder %s19, 0
      %p60 = por %p58, %p59
      %s61 = ssub.s32 %s20, %s32
      %s62 = ssub.s32 %s21, %s28
      %s63 = sor.u32 %s61, %s62
      %p64 = scmp.eq.s32.totalorder %s63, 0
      %s66 = sadd.s32 %s65, 1
      %s67 = scalar_select %p64, %s65, %s66
      %p70 = pneg %p64
      %p71 = scmp.eq.s32.totalorder %s13, 1
      %p72 = por %p70, %p71
      %p73 = scmp.ne.s32.totalorder %s65, %s68
      %p74 = scmp.eq.s32.totalorder %s13, 0
      %p75 = por %p73, %p74
      %p76 = scmp.ne.s32.totalorder %s65, %s68
      %p77 = scmp.eq.s32.totalorder %s18, 1
      %p78 = por %p76, %p77
      %p79 = scmp.ne.s32.totalorder %s68, %s69
      %p80 = scmp.eq.s32.totalorder %s18, 0
      %p81 = por %p79, %p80
      %p82 = scmp.ne.s32.totalorder %s68, %s69
      %p83 = scmp.eq.s32.totalorder %s19, 1
      %p84 = por %p82, %p83
      %p86 = scmp.ne.s32.totalorder %s69, %s85
      %p87 = scmp.eq.s32.totalorder %s19, 0
      %p88 = por %p86, %p87
      %p89 = scmp.le.s32.totalorder 1, %s13
      %p90 = scmp.lt.s32.totalorder %s13, 3
      %p91 = pnand %p89, %p90
      %p92 = pneg %p91
      // Predicated region
      $region9: #{tpu_custom_call.1} parent=5 // pred_check
        _
      $region10: #{tpu_custom_call.1} parent=5 // pred_check_branch
        %94 = sbr.rel (%p91) target = $region12
      $region11: #{tpu_custom_call.1} parent=5 // pred_region
        %s95 = ssub.s32 %s13, 1
      $region12: #{tpu_custom_call.1} parent=5 // pred_fallthru
        _
      %p96 = scmp.lt.s32.totalorder %s13, 2
      // Predicated region
      $region13: #{tpu_custom_call.1} parent=5 // pred_check
        %p97 = pneg %p96
      $region14: #{tpu_custom_call.1} parent=5 // pred_check_branch
        %99 = sbr.rel (%p97) target = $region16
      $region15: #{tpu_custom_call.1} parent=5 // pred_region
        // Predicated region
        $region17: #{tpu_custom_call.1} parent=15 // pred_check
          %p100 = pneg %p47
        $region18: #{tpu_custom_call.1} parent=15 // pred_check_branch
          %102 = sbr.rel (%p100) target = $region20
        $region19: #{tpu_custom_call.1} parent=15 // pred_region
          %s103 = sand.u32 %s37, 1
          %s104 = scalar_lea.sflag [#allocation3], %s103
          %s105 = sand.u32 %s37, 1
          %s106 = smul.addr %s105, 6
          %s107 = scalar_lea.vmem [#allocation2], %s106
          %s109 = ssub.s32 96, 96
          %110 = vsyncadd %s104, %s109
          %s111 = smul.addr %s20, 3
          %s112 = sadd.s32 %s21, %s111
          %s113 = smul.addr %s112, 32
          %s114 = scalar_lea.hbm %s0, %s113
          %s115 = sshll.u32 %s107, 4
          %s116 = int_to_ptr.vmem [resolvable:$true] %s115
          %121 = dma.hbm_to_vmem [thread:$0]  %s114, 96, %s116, %s104, 32, 32, 2
        $region20: #{tpu_custom_call.1} parent=15 // pred_fallthru
          _
      $region16: #{tpu_custom_call.1} parent=5 // pred_fallthru
        _
      %p122 = scmp.le.s32.totalorder 1, %s13
      %p123 = scmp.lt.s32.totalorder %s13, 3
      %p124 = pnand %p122, %p123
      %p125 = pneg %p124
      // Predicated region
      $region21: #{tpu_custom_call.1} parent=5 // pred_check
        _
      $region22: #{tpu_custom_call.1} parent=5 // pred_check_branch
        %127 = sbr.rel (%p124) target = $region24
      $region23: #{tpu_custom_call.1} parent=5 // pred_region
        %s128 = ssub.s32 %s13, 1
        %s129 = sand.u32 %s40, 1
        %s130 = scalar_lea.sflag [#allocation3], %s129
        %s131 = sand.u32 %s40, 1
        %s132 = smul.addr %s131, 6
        %s133 = scalar_lea.vmem [#allocation2], %s132
        // Predicated region
        $region25: #{tpu_custom_call.1} parent=23 // pred_check
          %p134 = pneg %p53
        $region26: #{tpu_custom_call.1} parent=23 // pred_check_branch
          %136 = sbr.rel (%p134) target = $region28
        $region27: #{tpu_custom_call.1} parent=23 // pred_region
          %137 = dma.done %s130, 96
        $region28: #{tpu_custom_call.1} parent=23 // pred_fallthru
          _
        %s138 = sand.u32 %s40, 1
        %s139 = scalar_lea.sflag [#allocation3], %s138
        %s140 = sand.u32 %s40, 1
        %s141 = smul.addr %s140, 6
        %s142 = scalar_lea.vmem [#allocation2], %s141
        %p143 = pneg %p53
        %p144 = pneg %p50
        %p145 = pneg %p81
        %p146 = pneg %p78
        %s147 = sand.u32 %s68, 1
        %s148 = scalar_lea.sflag [#allocation4], %s147
        %s149 = sand.u32 %s68, 1
        %s150 = smul.addr %s149, 6
        %s151 = scalar_lea.vmem [#allocation5], %s150
        %v152 = vld [vmem:[%s133] sm:$0x3]
        %v153 = vmax.f32 %v152, 1e-06
        %v154 = vmin.f32 %v153, 0.999999
        %s155 = scalar_lea.vmem %s133, 2 [#allocation2]
        %v156 = vld [vmem:[%s155] sm:$0x3]
        %v157 = vmax.f32 %v156, 1e-06
        %v158 = vmin.f32 %v157, 0.999999
        %s159 = scalar_lea.vmem %s133, 4 [#allocation2]
        %v160 = vld [vmem:[%s159] sm:$0x3]
        %v161 = vmax.f32 %v160, 1e-06
        %v162 = vmin.f32 %v161, 0.999999
        %v163 = vmul.f32 %v154, 0.3811
        %v164 = vmul.f32 %v158, 0.1967
        %v165 = vadd.f32 %v163, %v164
        %v166 = vmul.f32 %v162, 0.0241
        %v167 = vadd.f32 %v165, %v166
        %v168 = vmul.f32 %v154, 0.5783
        %v169 = vmul.f32 %v158, 0.7244
        %v170 = vadd.f32 %v168, %v169
        %v171 = vmul.f32 %v162, 0.1288
        %v172 = vadd.f32 %v170, %v171
        %v173 = vmul.f32 %v154, 0.0402
        %v174 = vmul.f32 %v158, 0.0782
        %v175 = vadd.f32 %v173, %v174
        %v176 = vmul.f32 %v162, 0.8444
        %v177 = vadd.f32 %v175, %v176
        %v178 = vlog2.pop %v167
        %v179 = vmul.f32 %v178, 0.6931472
        %v180 = vmul.f32 %v179, 0.57735026
        %v181 = vlog2.pop %v172
        %v182 = vmul.f32 %v181, 0.6931472
        %v183 = vmul.f32 %v182, 0.4082483
        %v184 = vlog2.pop %v177
        %v185 = vmul.f32 %v184, 0.6931472
        %v186 = vmul.f32 %v185, 0.70710677
        %v187 = vadd.f32 %v180, %v183
        %v188 = vadd.f32 %v187, %v186
        %189 = vst [vmem:[%s151] sm:$0x3] %v188
        %v190 = vsub.f32 %v187, %v186
        %s191 = scalar_lea.vmem %s151, 2 [#allocation5]
        %192 = vst [vmem:[%s191] sm:$0x3] %v190
        %v193 = vmul.f32 %v183, 2.0
        %v194 = vsub.f32 %v180, %v193
        %s195 = scalar_lea.vmem %s151, 4 [#allocation5]
        %196 = vst [vmem:[%s195] sm:$0x3] %v194
        %s197 = sand.u32 %s68, 1
        %s198 = scalar_lea.sflag [#allocation4], %s197
        %s199 = sand.u32 %s68, 1
        %s200 = smul.addr %s199, 6
        %s201 = scalar_lea.vmem [#allocation5], %s200
        // Predicated region
        $region29: #{tpu_custom_call.1} parent=23 // pred_check
          %p202 = pneg %p78
        $region30: #{tpu_custom_call.1} parent=23 // pred_check_branch
          %204 = sbr.rel (%p202) target = $region32
        $region31: #{tpu_custom_call.1} parent=23 // pred_region
          %s206 = ssub.s32 96, 96
          %207 = vsyncadd %s198, %s206
          %s208 = smul.addr %s22, 3
          %s209 = sadd.s32 %s23, %s208
          %s210 = smul.addr %s209, 32
          %s211 = scalar_lea.hbm %s1, %s210
          %s212 = sshll.u32 %s201, 4
          %s213 = int_to_ptr.vmem [resolvable:$true] %s212
          %218 = dma.vmem_to_hbm [thread:$0]  %s213, 96, %s211, %s198, 32, 32, 2
        $region32: #{tpu_custom_call.1} parent=23 // pred_fallthru
          _
      $region24: #{tpu_custom_call.1} parent=5 // pred_fallthru
        _
      %p219 = scmp.le.s32.totalorder 2, %s13
      // Predicated region
      $region33: #{tpu_custom_call.1} parent=5 // pred_check
        %p220 = pneg %p219
      $region34: #{tpu_custom_call.1} parent=5 // pred_check_branch
        %222 = sbr.rel (%p220) target = $region36
      $region35: #{tpu_custom_call.1} parent=5 // pred_region
        %s223 = ssub.s32 %s13, 2
        // Predicated region
        $region37: #{tpu_custom_call.1} parent=35 // pred_check
          %p224 = pneg %p84
        $region38: #{tpu_custom_call.1} parent=35 // pred_check_branch
          %226 = sbr.rel (%p224) target = $region40
        $region39: #{tpu_custom_call.1} parent=35 // pred_region
          %s227 = sand.u32 %s69, 1
          %s228 = scalar_lea.sflag [#allocation4], %s227
          %s229 = sand.u32 %s69, 1
          %s230 = smul.addr %s229, 6
          %s231 = scalar_lea.vmem [#allocation5], %s230
          %232 = dma.done %s228, 96
        $region40: #{tpu_custom_call.1} parent=35 // pred_fallthru
          _
      $region36: #{tpu_custom_call.1} parent=5 // pred_fallthru
        _
    $region6: #{tpu_custom_call.1} parent=1 // loop_footer
      %s17 = sadd.s32 1, %s13
    $region7: #{tpu_custom_call.1} parent=1 // loop_footer_branch
      %12 = sbr.rel target = $region3
    $region8: #{tpu_custom_call.1} parent=1 // loop_exit
      _
    %233 = vsyncpa [#allocation3], 1
    %s234 = scalar_lea.sflag [#allocation3], 1
    %235 = vsyncpa %s234, 1
    %236 = vsyncpa [#allocation4], 1
    %s237 = scalar_lea.sflag [#allocation4], 1
    %238 = vsyncpa %s237, 1

</llo_original>
